<compile_context>
chip_gen: v7x
topology: tpu7x:2x2x1
jax: 0.10.0
libtpu: 0.0.40
codegen_flags: <defaults>
</compile_context>

<pallas_src>
import functools

import jax
import jax.numpy as jnp
from jax.experimental import pallas as pl
from jax.experimental.pallas import tpu as pltpu


# ---------------------------------------------------------------------------
# Per-generation VMEM plan: (vmem_limit_bytes or None, buffer budget, max tile)
# ---------------------------------------------------------------------------
def _vmem_plan():
    try:
        kind = jax.devices()[0].device_kind.lower()
    except Exception:
        kind = ""
    if any(t in kind for t in ("v5e", "v5 lite", "v5litepod", "v6")):
        # 128 MiB physical VMEM: grow tiles past the >=512-lane roofline knee.
        return 96 * 1024 * 1024, 64 * 1024 * 1024, 4096
    if "v7" in kind:
        # 64 MiB physical per TensorCore: keep the conservative plan.
        return 32 * 1024 * 1024, 20 * 1024 * 1024, 2048
    # Unknown / older hardware: stay inside the default scoped limit.
    return None, 8 * 1024 * 1024, 2048


# ---------------------------------------------------------------------------
# Tile / fold selection
# ---------------------------------------------------------------------------
def _pick_cout_tile(Cout, C, w_bytes, weight_budget):
    """Keep the whole weight resident unless it exceeds the VMEM budget."""
    if Cout < 128 or Cout * C * w_bytes <= weight_budget:
        return Cout
    tn = (weight_budget // (C * w_bytes)) // 128 * 128
    tn = int(max(128, min(tn, (Cout // 128) * 128)))
    return tn


def _pick_batch_fold(N, HW):
    """Fold several small-spatial images into one block to amortize grid-step
    overhead.  >=128 lanes per image already amortizes fine."""
    # TODO(synk): packing multiple images' HW onto the lane axis (truly
    # lane-dense stores for 7x7/14x14) needs a real HBM transpose; not done.
    if HW >= 128:
        return 1
    return int(min(N, max(1, 256 // HW)))


def _pick_hw_tile(HW, C, tn, bn, *, x_bytes, w_bytes, out_bytes, h_bytes,
                  k_tiled, budget, max_tile):
    """Largest lane-aligned HW tile fitting the VMEM buffer budget.

    Accounts for double-buffered x and out tiles, double-buffered weight,
    scale/bias, and the optional resident-h scratch when Cout is tiled.
    """
    fixed = 2 * tn * C * w_bytes + 4 * C * 4
    per_col = bn * (2 * C * x_bytes + 2 * tn * out_bytes
                    + (C * h_bytes if k_tiled else 0))
    t = max((budget - fixed) // per_col, 128)
    t = min(t, max_tile)
    if HW <= t:
        return HW                       # full extent: always a legal block
    return max((t // 128) * 128, 128)


def _pick_stats_tile(HW, C, budget, max_tile):
    per_col = 2 * C * 4                 # double-buffered (1, C, t) f32 block
    t = max(budget // per_col, 128)
    t = min(t, max_tile)
    if HW <= t:
        return HW
    return max((t // 128) * 128, 128)


# ---------------------------------------------------------------------------
# BN batch-statistics pre-pass: one streaming read of x -> per-channel
# (sum, sum of squares).  Accumulates directly into resident output blocks.
# ---------------------------------------------------------------------------
def _bn_stats_kernel(x_ref, sum_ref, sumsq_ref, *, hw, t_hw):
    @pl.when((pl.program_id(0) == 0) & (pl.program_id(1) == 0))
    def _():
        sum_ref[...] = jnp.zeros_like(sum_ref)
        sumsq_ref[...] = jnp.zeros_like(sumsq_ref)

    x = x_ref[0]                                          # (C, t_hw)
    if hw % t_hw != 0:
        # Mask the ragged tail so input padding never contaminates the sums.
        col = (jax.lax.broadcasted_iota(jnp.int32, x.shape, 1)
               + pl.program_id(1) * t_hw)
        x = jnp.where(col < hw, x, 0.0)
    sum_ref[...] += jnp.sum(x, axis=-1, keepdims=True)
    sumsq_ref[...] += jnp.sum(x * x, axis=-1, keepdims=True)


def _bn_stats(x3d, *, budget, max_tile, vmem_limit):
    N, C, HW = x3d.shape
    t = _pick_stats_tile(HW, C, budget, max_tile)
    grid = (N, pl.cdiv(HW, t))
    kernel = functools.partial(_bn_stats_kernel, hw=HW, t_hw=t)
    s, ss = pl.pallas_call(
        kernel,
        out_shape=(jax.ShapeDtypeStruct((C, 1), jnp.float32),
                   jax.ShapeDtypeStruct((C, 1), jnp.float32)),
        grid_spec=pltpu.PrefetchScalarGridSpec(
            num_scalar_prefetch=0,
            grid=grid,
            in_specs=[pl.BlockSpec((1, C, t), lambda n, j: (n, 0, j))],
            out_specs=[pl.BlockSpec((C, 1), lambda n, j: (0, 0)),
                       pl.BlockSpec((C, 1), lambda n, j: (0, 0))],
        ),
        compiler_params=pltpu.CompilerParams(
            dimension_semantics=("arbitrary", "arbitrary"),
            vmem_limit_bytes=vmem_limit,
        ),
        cost_estimate=pl.CostEstimate(
            flops=int(3 * N * C * HW), transcendentals=0,
            bytes_accessed=int(4 * N * C * HW + 8 * C)),
    )(x3d)
    return s, ss


# ---------------------------------------------------------------------------
# Main fused BN + ReLU + 1x1-conv kernel
# ---------------------------------------------------------------------------
def _transition_kernel(x_ref, scale_ref, bias_ref, w_ref, o_ref, *scratch,
                       bn, bf16, k_tiled):
    # x_ref:     (bn, C, t_hw)   activations, HW on lanes
    # scale_ref: (C, 1)          folded BN scale  (gamma * rsqrt(var + eps))
    # bias_ref:  (C, 1)          folded BN bias   (beta - mean * scale)
    # w_ref:     (tn, C)         1x1-conv weight tile (bf16 if bf16 path)
    # o_ref:     (bn, tn, t_hw)  output block
    # scratch:   optional (bn, C, t_hw) VMEM holding h = relu(BN(x)), only
    #            when the Cout axis is tiled (avoids K-fold recompute).
    scale = scale_ref[...]
    bias = bias_ref[...]
    w = w_ref[...]

    def bn_relu(b):
        h = jnp.maximum(x_ref[b] * scale + bias, 0.0)     # (C, t_hw) f32
        return h.astype(jnp.bfloat16) if bf16 else h

    if k_tiled:
        h_ref = scratch[0]

        @pl.when(pl.program_id(2) == 0)
        def _():
            for b in range(bn):
                h_ref[b] = bn_relu(b)

        for b in range(bn):
            o_ref[b] = jnp.dot(
                w, h_ref[b],
                preferred_element_type=jnp.float32).astype(o_ref.dtype)
    else:
        for b in range(bn):
            o_ref[b] = jnp.dot(
                w, bn_relu(b),
                preferred_element_type=jnp.float32).astype(o_ref.dtype)


def transition_forward(x_nchw, gamma, beta, conv_w, *, eps=1e-5,
                       use_bf16_matmul=False, out_dtype=None,
                       weight_vmem_budget_bytes=None):
    """x_nchw: (N, C, H, W) float32.  conv_w: (Cout, C, 1, 1) PyTorch layout."""
    N, C, H, W = x_nchw.shape
    Cout = conv_w.shape[0]
    HW = H * W
    out_dtype = jnp.dtype(x_nchw.dtype) if out_dtype is None else jnp.dtype(out_dtype)

    vmem_limit, budget, max_tile = _vmem_plan()

    # Free reshape: keep NCHW, just flatten the spatial axes.
    x3d = x_nchw.reshape(N, C, HW).astype(jnp.float32)

    # ---- BN folding (training-mode batch stats, biased variance) -----------
    s, ss = _bn_stats(x3d, budget=budget, max_tile=max_tile,
                      vmem_limit=vmem_limit)
    cnt = float(N * HW)
    mean = s[:, 0] / cnt
    # E[x^2]-mean^2 can cancel for ill-conditioned inputs; clamp keeps var>=0.
    # TODO(synk): a two-pass / Welford variance would match PyTorch bit-wise on
    # pathological inputs, at the cost of one more streaming pass over x.
    var = jnp.maximum(ss[:, 0] / cnt - mean * mean, 0.0)
    scale = gamma.astype(jnp.float32) * jax.lax.rsqrt(var + eps)
    bias = beta.astype(jnp.float32) - mean * scale
    scale2d = scale.reshape(C, 1)
    bias2d = bias.reshape(C, 1)

    # ---- weights: wrapper-side cast so the DMA itself moves fewer bytes ----
    w_bytes = 2 if use_bf16_matmul else 4
    w_dtype = jnp.bfloat16 if use_bf16_matmul else jnp.float32
    w2d = conv_w.reshape(Cout, C).astype(w_dtype)
    # NOTE: x stays f32 in HBM (the input is f32); h is cast to bf16 on the
    # VPU inside the kernel when use_bf16_matmul=True.

    if weight_vmem_budget_bytes is None:
        weight_budget = min(8 * 1024 * 1024, budget // 4)
    else:
        weight_budget = weight_vmem_budget_bytes

    tn = _pick_cout_tile(Cout, C, w_bytes, weight_budget)
    k_tiles = pl.cdiv(Cout, tn)
    k_tiled = k_tiles > 1

    bn = _pick_batch_fold(N, HW)
    out_bytes = out_dtype.itemsize
    h_bytes = 2 if use_bf16_matmul else 4
    t_hw = _pick_hw_tile(HW, C, tn, bn, x_bytes=4, w_bytes=w_bytes,
                         out_bytes=out_bytes, h_bytes=h_bytes,
                         k_tiled=k_tiled, budget=budget, max_tile=max_tile)

    grid_n = pl.cdiv(N, bn)
    grid_j = pl.cdiv(HW, t_hw)
    # v7x has 2 TensorCores: expose >=2 blocks along "parallel" axes.
    if grid_n * grid_j * k_tiles < 2 and HW > 128:
        t_hw = max(128, ((pl.cdiv(HW, 2) + 127) // 128) * 128)
        grid_j = pl.cdiv(HW, t_hw)
    while grid_n * grid_j * k_tiles < 2 and bn > 1:
        bn = max(1, bn // 2)
        grid_n = pl.cdiv(N, bn)

    grid = (grid_n, grid_j, k_tiles)

    kernel = functools.partial(_transition_kernel, bn=bn,
                               bf16=use_bf16_matmul, k_tiled=k_tiled)

    scratch_shapes = []
    if k_tiled:
        scratch_shapes = [pltpu.VMEM(
            (bn, C, t_hw), jnp.bfloat16 if use_bf16_matmul else jnp.float32)]

    cost = pl.CostEstimate(
        flops=int(2 * N * HW * C * Cout + 3 * N * C * HW),
        transcendentals=0,
        bytes_accessed=int(4 * N * C * HW + w_bytes * Cout * C
                           + out_bytes * N * Cout * HW))

    out3d = pl.pallas_call(
        kernel,
        out_shape=jax.ShapeDtypeStruct((N, Cout, HW), out_dtype),
        grid_spec=pltpu.PrefetchScalarGridSpec(
            num_scalar_prefetch=0,
            grid=grid,
            in_specs=[
                # x slab: block index constant across the innermost Cout axis
                # -> not re-DMAed when k_tiles > 1.
                pl.BlockSpec((bn, C, t_hw), lambda n, j, k: (n, 0, j)),
                pl.BlockSpec((C, 1), lambda n, j, k: (0, 0)),
                pl.BlockSpec((C, 1), lambda n, j, k: (0, 0)),
                pl.BlockSpec((tn, C), lambda n, j, k: (k, 0)),
            ],
            out_specs=pl.BlockSpec((bn, tn, t_hw), lambda n, j, k: (n, k, j)),
            scratch_shapes=scratch_shapes,
        ),
        compiler_params=pltpu.CompilerParams(
            dimension_semantics=("parallel", "parallel",
                                 "arbitrary" if k_tiled else "parallel"),
            vmem_limit_bytes=vmem_limit,
        ),
        cost_estimate=cost,
    )(x3d, scale2d, bias2d, w2d)

    # Free reshape back to NCHW -- no transpose.
    return out3d.reshape(N, Cout, H, W)


# ---------------------------------------------------------------------------
if __name__ == "__main__":
    def reference(x, gamma, beta, conv_w, eps=1e-5):
        m = jnp.mean(x, axis=(0, 2, 3))
        v = jnp.mean((x - m[None, :, None, None]) ** 2, axis=(0, 2, 3))
        xh = ((x - m[None, :, None, None])
              * (gamma / jnp.sqrt(v + eps))[None, :, None, None]
              + beta[None, :, None, None])
        Co = conv_w.shape[0]
        return jnp.einsum("nchw,oc->nohw", jnp.maximum(xh, 0.0),
                          conv_w.reshape(Co, conv_w.shape[1]))

    def make_inputs(key, N, C, H, W, Cout):
        k1, k2, k3, k4, key = jax.random.split(key, 5)
        x = jax.random.normal(k1, (N, C, H, W), dtype=jnp.float32)
        gamma = 1.0 + 0.1 * jax.random.normal(k2, (C,), dtype=jnp.float32)
        beta = 0.1 * jax.random.normal(k3, (C,), dtype=jnp.float32)
        w = jax.random.normal(k4, (Cout, C, 1, 1),
                              dtype=jnp.float32) * (1.0 / C) ** 0.5
        return key, x, gamma, beta, w

    key = jax.random.PRNGKey(0)

    # --- main shape: N=2, C=4, H=W=16, Cout=8 (untiled, lane-dense stores) ---
    key, x, gamma, beta, conv_w = make_inputs(key, 2, 4, 16, 16, 8)
    out = jax.block_until_ready(transition_forward(x, gamma, beta, conv_w))
    ref = reference(x, gamma, beta, conv_w)
    assert out.shape == ref.shape
    assert jnp.allclose(out, ref, atol=1e-4, rtol=1e-4), \
        float(jnp.max(jnp.abs(out - ref)))

    # --- small-spatial shape: exercises image folding + non-128 lane width ---
    key, x, gamma, beta, conv_w = make_inputs(key, 4, 8, 7, 7, 16)
    out = jax.block_until_ready(transition_forward(x, gamma, beta, conv_w))
    ref = reference(x, gamma, beta, conv_w)
    assert jnp.allclose(out, ref, atol=1e-4, rtol=1e-4), \
        float(jnp.max(jnp.abs(out - ref)))

    # --- force the Cout-tiled path (resident-h scratch) with a tiny budget ---
    key, x, gamma, beta, conv_w = make_inputs(key, 2, 256, 4, 4, 256)
    out = jax.block_until_ready(
        transition_forward(x, gamma, beta, conv_w,
                           weight_vmem_budget_bytes=128 * 1024))
    ref = reference(x, gamma, beta, conv_w)
    assert jnp.allclose(out, ref, atol=1e-3, rtol=1e-3), \
        float(jnp.max(jnp.abs(out - ref)))

    print("KERNEL_OK")
</pallas_src>

<mosaic_0001>
module attributes {stable_mosaic.version = 11 : i64} {
  func.func @_bn_stats_kernel(%arg0: i32, %arg1: i32, %arg2: memref<1x4x256xf32, #tpu.memory_space<vmem>>, %arg3: memref<4x1xf32, #tpu.memory_space<vmem>>, %arg4: memref<4x1xf32, #tpu.memory_space<vmem>>) attributes {dimension_semantics = [#tpu.dimension_semantics<arbitrary>, #tpu.dimension_semantics<arbitrary>], iteration_bounds = array<i64: 2, 1>, scalar_prefetch = 0 : i64, scratch_operands = 0 : i64, tpu.core_type = #tpu.core_type<tc>, window_params = [{transform_indices = @transform_0, window_bounds = array<i64: 1, 4, 256>}, {pipeline_mode = #tpu.pipeline_mode<synchronous>, transform_indices = @transform_1, window_bounds = array<i64: 4, 1>}, {pipeline_mode = #tpu.pipeline_mode<synchronous>, transform_indices = @transform_2, window_bounds = array<i64: 4, 1>}]} {
    %c0_i32 = arith.constant 0 : i32
    %0 = arith.cmpi eq, %arg0, %c0_i32 : i32
    %c0_i32_0 = arith.constant 0 : i32
    %1 = arith.cmpi eq, %arg1, %c0_i32_0 : i32
    %2 = arith.andi %0, %1 : i1
    %3 = arith.extui %2 : i1 to i32
    %c0_i32_1 = arith.constant 0 : i32
    %4 = arith.cmpi ne, %3, %c0_i32_1 : i32
    scf.if %4 {
      %cst_13 = arith.constant 0.000000e+00 : f32
      %18 = vector.broadcast %cst_13 : f32 to vector<4x1xf32>
      %c0_14 = arith.constant 0 : index
      %c0_15 = arith.constant 0 : index
      %19 = vector.load %arg3[%c0_14, %c0_15] : memref<4x1xf32, #tpu.memory_space<vmem>>, vector<4x1xf32>
      tpu.vector_store %arg3[%c0_14, %c0_15], %18 {strides = array<i32>} : memref<4x1xf32, #tpu.memory_space<vmem>>, vector<4x1xf32>,
      %cst_16 = arith.constant 0.000000e+00 : f32
      %20 = vector.broadcast %cst_16 : f32 to vector<4x1xf32>
      %c0_17 = arith.constant 0 : index
      %c0_18 = arith.constant 0 : index
      %21 = vector.load %arg4[%c0_17, %c0_18] : memref<4x1xf32, #tpu.memory_space<vmem>>, vector<4x1xf32>
      tpu.vector_store %arg4[%c0_17, %c0_18], %20 {strides = array<i32>} : memref<4x1xf32, #tpu.memory_space<vmem>>, vector<4x1xf32>,
    } else {
    }
    %c0 = arith.constant 0 : index
    %c0_2 = arith.constant 0 : index
    %c0_3 = arith.constant 0 : index
    %5 = vector.load %arg2[%c0, %c0_2, %c0_3] : memref<1x4x256xf32, #tpu.memory_space<vmem>>, vector<1x4x256xf32>
    %6 = vector.shape_cast %5 : vector<1x4x256xf32> to vector<4x256xf32>
    %c0_4 = arith.constant 0 : index
    %c0_5 = arith.constant 0 : index
    %7 = vector.load %arg3[%c0_4, %c0_5] : memref<4x1xf32, #tpu.memory_space<vmem>>, vector<4x1xf32>
    %cst = arith.constant dense<0.000000e+00> : vector<4xf32>
    %8 = vector.multi_reduction <add>, %6, %cst [1] : vector<4x256xf32> to vector<4xf32>
    %9 = vector.shape_cast %8 : vector<4xf32> to vector<4x1xf32>
    %10 = arith.addf %7, %9 : vector<4x1xf32>
    %c0_6 = arith.constant 0 : index
    %c0_7 = arith.constant 0 : index
    %11 = vector.load %arg3[%c0_6, %c0_7] : memref<4x1xf32, #tpu.memory_space<vmem>>, vector<4x1xf32>
    tpu.vector_store %arg3[%c0_6, %c0_7], %10 {strides = array<i32>} : memref<4x1xf32, #tpu.memory_space<vmem>>, vector<4x1xf32>,
    %c0_8 = arith.constant 0 : index
    %c0_9 = arith.constant 0 : index
    %12 = vector.load %arg4[%c0_8, %c0_9] : memref<4x1xf32, #tpu.memory_space<vmem>>, vector<4x1xf32>
    %13 = arith.mulf %6, %6 : vector<4x256xf32>
    %cst_10 = arith.constant dense<0.000000e+00> : vector<4xf32>
    %14 = vector.multi_reduction <add>, %13, %cst_10 [1] : vector<4x256xf32> to vector<4xf32>
    %15 = vector.shape_cast %14 : vector<4xf32> to vector<4x1xf32>
    %16 = arith.addf %12, %15 : vector<4x1xf32>
    %c0_11 = arith.constant 0 : index
    %c0_12 = arith.constant 0 : index
    %17 = vector.load %arg4[%c0_11, %c0_12] : memref<4x1xf32, #tpu.memory_space<vmem>>, vector<4x1xf32>
    tpu.vector_store %arg4[%c0_11, %c0_12], %16 {strides = array<i32>} : memref<4x1xf32, #tpu.memory_space<vmem>>, vector<4x1xf32>,
    return
  }
  func.func @transform_0(%arg0: i32, %arg1: i32) -> (i32, i32, i32) {
    %c0_i32 = arith.constant 0 : i32
    %c0_i32_0 = arith.constant 0 : i32
    return %arg0, %c0_i32, %arg1 : i32, i32, i32
  }
  func.func @transform_1(%arg0: i32, %arg1: i32) -> (i32, i32) {
    %c0_i32 = arith.constant 0 : i32
    %c0_i32_0 = arith.constant 0 : i32
    %c0_i32_1 = arith.constant 0 : i32
    return %c0_i32, %c0_i32_0 : i32, i32
  }
  func.func @transform_2(%arg0: i32, %arg1: i32) -> (i32, i32) {
    %c0_i32 = arith.constant 0 : i32
    %c0_i32_0 = arith.constant 0 : i32
    %c0_i32_1 = arith.constant 0 : i32
    return %c0_i32, %c0_i32_0 : i32, i32
  }
}

</mosaic_0001>

<llo_original>
// kernel: tpu_custom_call.1
$region0: #{tpu_custom_call.1}
  #allocation0 [shape = 'u32[]', space=smem, size = 0x4, offset = 0x4, fixed_abs, tag = 'smem constant byte address 0x4 - core index']
  #allocation1 [shape = 'u32[144,128]{1,0:T(1,128)}', space=vmem, size = 0x12000, scoped, tag = 'internal scratch']
  %s0 = inlined_call_operand.hbm [shape: f32[2,4,256], index: 0, kind: input, shape index: {}]
  %s1 = inlined_call_operand.vmem [shape: f32[4,1], index: 1, kind: output, shape index: {0}]
  %s2 = inlined_call_operand.vmem [shape: f32[4,1], index: 2, kind: output, shape index: {1}]
  %3 = xla_tuple %s1, %s2
  %s4 = sld [smem:[#allocation0]]
  $region53: #{tpu_custom_call.1} parent=0
    _
  %s6 = ssub.s32 1, %s4
  %s7 = scalar_select 0, %s6, %s4
  $region1: #{tpu_custom_call.1} parent=0
    #allocation2 [shape = 'u8[8192]{0}', space=vmem, size = 0x2000, scoped, tag = 'input window, operand 0']
    #allocation3 [shape = 's32[2]{0}', space=sflag, size = 0x8, scoped, tag = 'scoped memory for tpu_custom_call.1']
    %8 = vsyncpa [#allocation3], 0
    %s9 = scalar_lea.sflag [#allocation3], 1
    %10 = vsyncpa %s9, 0
    loop: start=0, step=1, limit=4
    $region2: #{tpu_custom_call.1} parent=1 // loop_pre_header
      _
    $region3: #{tpu_custom_call.1} parent=1 // loop_header
      %s12 = sphi 0, %s16
      %p13 = scmp.ge.s32.totalorder %s12, 4
      %s19 = sphi 0, %s31
      %s20 = sphi 0, %s27
      %s21 = sphi 0, %s19
      %s22 = sphi 0, %s20
      %s23 = sphi 0, %s21
      %s24 = sphi 0, %s22
      %s36 = sphi 0, %s38
      %s39 = sphi 0, %s36
      %s40 = sphi 0, %s39
      %s56 = sphi 0, %s40
      %s60 = sphi 0, %s60
      %s62 = sphi 0, %s60
      %s63 = sphi 0, %s62
      %s77 = sphi 0, %s63
      %s81 = sphi 0, %s81
      %s83 = sphi 0, %s81
      %s84 = sphi 0, %s83
      %s98 = sphi 0, %s84
    $region4: #{tpu_custom_call.1} parent=1 // loop_header_branch
      %15 = sbr.rel (%p13) target = $region8
    $region5: #{tpu_custom_call.1} parent=1 // loop_body
      %s17 = ssub.s32 %s12, 1
      %s18 = ssub.s32 %s12, 2
      %s25 = sadd.s32 1, %s20
      %p26 = scmp.ge.s32.totalorder %s25, 1
      %s27 = scalar_select %p26, 0, %s25
      %s28 = sadd.s32 1, %s19
      %s29 = scalar_select %p26, %s28, %s19
      %p30 = scmp.ge.s32.totalorder %s29, 2
      %s31 = scalar_select %p30, 0, %s29
      %s32 = ssub.s32 %s19, %s31
      %s33 = ssub.s32 %s20, %s27
      %s34 = sor.u32 %s32, %s33
      %p35 = scmp.eq.s32.totalorder %s34, 0
      %s37 = sadd.s32 %s36, 1
      %s38 = scalar_select %p35, %s36, %s37
      %p41 = pneg %p35
      %p42 = scmp.eq.s32.totalorder %s12, 1
      %p43 = por %p41, %p42
      %p44 = scmp.ne.s32.totalorder %s36, %s39
      %p45 = scmp.eq.s32.totalorder %s12, 0
      %p46 = por %p44, %p45
      %p47 = scmp.ne.s32.totalorder %s36, %s39
      %p48 = scmp.eq.s32.totalorder %s17, 1
      %p49 = por %p47, %p48
      %p50 = scmp.ne.s32.totalorder %s39, %s40
      %p51 = scmp.eq.s32.totalorder %s17, 0
      %p52 = por %p50, %p51
      %p53 = scmp.ne.s32.totalorder %s39, %s40
      %p54 = scmp.eq.s32.totalorder %s18, 1
      %p55 = por %p53, %p54
      %p57 = scmp.ne.s32.totalorder %s40, %s56
      %p58 = scmp.eq.s32.totalorder %s18, 0
      %p59 = por %p57, %p58
      %s61 = sadd.s32 %s60, 1
      %p64 = scmp.eq.s32.totalorder %s12, 1
      %p65 = scmp.ne.s32.totalorder %s60, %s62
      %p66 = scmp.eq.s32.totalorder %s12, 0
      %p67 = por %p65, %p66
      %p68 = scmp.ne.s32.totalorder %s60, %s62
      %p69 = scmp.eq.s32.totalorder %s17, 1
      %p70 = por %p68, %p69
      %p71 = scmp.ne.s32.totalorder %s62, %s63
      %p72 = scmp.eq.s32.totalorder %s17, 0
      %p73 = por %p71, %p72
      %p74 = scmp.ne.s32.totalorder %s62, %s63
      %p75 = scmp.eq.s32.totalorder %s18, 1
      %p76 = por %p74, %p75
      %p78 = scmp.ne.s32.totalorder %s63, %s77
      %p79 = scmp.eq.s32.totalorder %s18, 0
      %p80 = por %p78, %p79
      %s82 = sadd.s32 %s81, 1
      %p85 = scmp.eq.s32.totalorder %s12, 1
      %p86 = scmp.ne.s32.totalorder %s81, %s83
      %p87 = scmp.eq.s32.totalorder %s12, 0
      %p88 = por %p86, %p87
      %p89 = scmp.ne.s32.totalorder %s81, %s83
      %p90 = scmp.eq.s32.totalorder %s17, 1
      %p91 = por %p89, %p90
      %p92 = scmp.ne.s32.totalorder %s83, %s84
      %p93 = scmp.eq.s32.totalorder %s17, 0
      %p94 = por %p92, %p93
      %p95 = scmp.ne.s32.totalorder %s83, %s84
      %p96 = scmp.eq.s32.totalorder %s18, 1
      %p97 = por %p95, %p96
      %p99 = scmp.ne.s32.totalorder %s84, %s98
      %p100 = scmp.eq.s32.totalorder %s18, 0
      %p101 = por %p99, %p100
      %p102 = scmp.le.s32.totalorder 1, %s12
      %p103 = scmp.lt.s32.totalorder %s12, 3
      %p104 = pnand %p102, %p103
      %p105 = pneg %p104
      // Predicated region
      $region9: #{tpu_custom_call.1} parent=5 // pred_check
        _
      $region10: #{tpu_custom_call.1} parent=5 // pred_check_branch
        %107 = sbr.rel (%p104) target = $region12
      $region11: #{tpu_custom_call.1} parent=5 // pred_region
        %s108 = ssub.s32 %s12, 1
      $region12: #{tpu_custom_call.1} parent=5 // pred_fallthru
        _
      %p109 = scmp.lt.s32.totalorder %s12, 2
      // Predicated region
      $region13: #{tpu_custom_call.1} parent=5 // pred_check
        %p110 = pneg %p109
      $region14: #{tpu_custom_call.1} parent=5 // pred_check_branch
        %112 = sbr.rel (%p110) target = $region16
      $region15: #{tpu_custom_call.1} parent=5 // pred_region
        // Predicated region
        $region17: #{tpu_custom_call.1} parent=15 // pred_check
          %p113 = pneg %p46
        $region18: #{tpu_custom_call.1} parent=15 // pred_check_branch
          %115 = sbr.rel (%p113) target = $region20
        $region19: #{tpu_custom_call.1} parent=15 // pred_region
          %s116 = sand.u32 %s36, 1
          %s117 = scalar_lea.sflag [#allocation3], %s116
          %s118 = sand.u32 %s36, 1
          %s119 = smul.addr %s118, 8
          %s120 = scalar_lea.vmem [#allocation2], %s119
          %s121 = smul.u32 2, %s20
          %s123 = ssub.s32 128, 128
          %124 = vsyncadd %s117, %s123
          %s125 = smul.addr %s19, 2
          %s126 = sadd.s32 %s121, %s125
          %s127 = smul.addr %s126, 64
          %s128 = scalar_lea.hbm %s0, %s127
          %s130 = sshll.u32 %s120, 4
          %s131 = int_to_ptr.vmem [resolvable:$true] %s130
          %133 = dma.hbm_to_vmem [thread:$0]  %s128, 128, %s131, %s117
        $region20: #{tpu_custom_call.1} parent=15 // pred_fallthru
          _
      $region16: #{tpu_custom_call.1} parent=5 // pred_fallthru
        _
      %p134 = scmp.le.s32.totalorder 1, %s12
      %p135 = scmp.lt.s32.totalorder %s12, 3
      %p136 = pnand %p134, %p135
      %p137 = pneg %p136
      // Predicated region
      $region21: #{tpu_custom_call.1} parent=5 // pred_check
        _
      $region22: #{tpu_custom_call.1} parent=5 // pred_check_branch
        %139 = sbr.rel (%p136) target = $region24
      $region23: #{tpu_custom_call.1} parent=5 // pred_region
        %s140 = ssub.s32 %s12, 1
        %s141 = sand.u32 %s39, 1
        %s142 = scalar_lea.sflag [#allocation3], %s141
        %s143 = sand.u32 %s39, 1
        %s144 = smul.addr %s143, 8
        %s145 = scalar_lea.vmem [#allocation2], %s144
        // Predicated region
        $region25: #{tpu_custom_call.1} parent=23 // pred_check
          %p146 = pneg %p52
        $region26: #{tpu_custom_call.1} parent=23 // pred_check_branch
          %148 = sbr.rel (%p146) target = $region28
        $region27: #{tpu_custom_call.1} parent=23 // pred_region
          %149 = dma.done %s142, 128
        $region28: #{tpu_custom_call.1} parent=23 // pred_fallthru
          _
        %s150 = sand.u32 %s39, 1
        %s151 = scalar_lea.sflag [#allocation3], %s150
        %s152 = sand.u32 %s39, 1
        %s153 = smul.addr %s152, 8
        %s154 = scalar_lea.vmem [#allocation2], %s153
        %p155 = pneg %p52
        %p156 = pneg %p49
        %p157 = pneg %p73
        %p158 = pneg %p70
        %p159 = pneg %p94
        %p160 = pneg %p91
        %s161 = smul.u32 2, %s22
        %p162 = scmp.eq.s32.totalorder %s21, 0
        %p163 = scmp.eq.s32.totalorder %s22, 0
        %p164 = pnand %p162, %p163
        %p165 = pneg %p164
        // Predicated region
        $region29: #{tpu_custom_call.1} parent=23 // pred_check
          _
        $region30: #{tpu_custom_call.1} parent=23 // pred_check_branch
          %167 = sbr.rel (%p164) target = $region32
        $region31: #{tpu_custom_call.1} parent=23 // pred_region
          %vm168 = vcmask 3072
          %169 = vst.msk [vmem:[%s1] sm:$0xf] %vm168, 0.0
          %170 = vst.msk [vmem:[%s2] sm:$0xf] %vm168, 0.0
        $region32: #{tpu_custom_call.1} parent=23 // pred_fallthru
          _
        %v171 = vld [vmem:[%s145] sm:$0xff]
        %v172 = vld [vmem:[%s1] sm:$0xf]
        %v174 = vcombine.high %v171, %v171
        %vm176 = vcmask 1043456
        %v177 = vsel %vm176, %v171, 0.0
        %v178 = vsel %vm176, %v174, 0.0
        %v179 = vadd.f32 %v177, %v178
        %180 = vadd.xlane.f32.xlu0 %v179
        %v181 = vpop.xlane.xlu0 %180
        %v182 = vadd.f32 %v172, %v181
        %vm183 = vcmask 3072
        %184 = vst.msk [vmem:[%s1] sm:$0xf] %vm183, %v182
        %v185 = vld [vmem:[%s2] sm:$0xf]
        %v186 = vmul.f32 %v171, %v171
        %v188 = vcombine.high %v186, %v186
        %v190 = vsel %vm176, %v186, 0.0
        %v191 = vsel %vm176, %v188, 0.0
        %v192 = vadd.f32 %v190, %v191
        %193 = vadd.xlane.f32.xlu0 %v192
        %v194 = vpop.xlane.xlu0 %193
        %v195 = vadd.f32 %v185, %v194
        %196 = vst.msk [vmem:[%s2] sm:$0xf] %vm183, %v195
        // Predicated region
        $region33: #{tpu_custom_call.1} parent=23 // pred_check
          %p197 = pneg %p70
        $region34: #{tpu_custom_call.1} parent=23 // pred_check_branch
          %199 = sbr.rel (%p197) target = $region36
        $region35: #{tpu_custom_call.1} parent=23 // pred_region
          _
        $region36: #{tpu_custom_call.1} parent=23 // pred_fallthru
          _
        // Predicated region
        $region37: #{tpu_custom_call.1} parent=23 // pred_check
          %p200 = pneg %p91
        $region38: #{tpu_custom_call.1} parent=23 // pred_check_branch
          %202 = sbr.rel (%p200) target = $region40
        $region39: #{tpu_custom_call.1} parent=23 // pred_region
          _
        $region40: #{tpu_custom_call.1} parent=23 // pred_fallthru
          _
        // Predicated region
        $region41: #{tpu_custom_call.1} parent=23 // pred_check
          %p203 = pneg %p70
        $region42: #{tpu_custom_call.1} parent=23 // pred_check_branch
          %205 = sbr.rel (%p203) target = $region44
        $region43: #{tpu_custom_call.1} parent=23 // pred_region
          _
        $region44: #{tpu_custom_call.1} parent=23 // pred_fallthru
          _
        // Predicated region
        $region45: #{tpu_custom_call.1} parent=23 // pred_check
          %p206 = pneg %p91
        $region46: #{tpu_custom_call.1} parent=23 // pred_check_branch
          %208 = sbr.rel (%p206) target = $region48
        $region47: #{tpu_custom_call.1} parent=23 // pred_region
          _
        $region48: #{tpu_custom_call.1} parent=23 // pred_fallthru
          _
      $region24: #{tpu_custom_call.1} parent=5 // pred_fallthru
        _
      %p209 = scmp.le.s32.totalorder 2, %s12
      // Predicated region
      $region49: #{tpu_custom_call.1} parent=5 // pred_check
        %p210 = pneg %p209
      $region50: #{tpu_custom_call.1} parent=5 // pred_check_branch
        %212 = sbr.rel (%p210) target = $region52
      $region51: #{tpu_custom_call.1} parent=5 // pred_region
        %s213 = ssub.s32 %s12, 2
      $region52: #{tpu_custom_call.1} parent=5 // pred_fallthru
        _
    $region6: #{tpu_custom_call.1} parent=1 // loop_footer
      %s16 = sadd.s32 1, %s12
    $region7: #{tpu_custom_call.1} parent=1 // loop_footer_branch
      %11 = sbr.rel target = $region3
    $region8: #{tpu_custom_call.1} parent=1 // loop_exit
      _
    %214 = vsyncpa [#allocation3], 1
    %s215 = scalar_lea.sflag [#allocation3], 1
    %216 = vsyncpa %s215, 1

</llo_original>
